<compile_context>
chip_gen: v6e
topology: v6e:2x2x1
jax: 0.10.0
libtpu: 0.0.40
codegen_flags: <defaults>
</compile_context>

<pallas_src>
import numpy as np
import jax
import jax.numpy as jnp
from jax.experimental import pallas as pl
from jax.experimental.pallas import tpu as pltpu


def _round_up(a, b):
    return ((a + b - 1) // b) * b


def _make_loss_kernel(type_loss: str, regression: bool, reduction: str):
    """Builds the Pallas kernel body (config is static / closed over)."""

    def kernel(x_ref, t_ref, o_ref):
        # Inputs are DMA'd in their native storage dtype; compute in f32 for
        # numerical parity with the reference (cast VALU work hides under DMA).
        x = x_ref[...].astype(jnp.float32)
        t = t_ref[...].astype(jnp.float32)

        if not regression:
            # numerically-stable (log-)softmax over the class (lane) axis
            m = jnp.max(x, axis=-1, keepdims=True)
            z = x - m
            ez = jnp.exp(z)
            denom = jnp.sum(ez, axis=-1, keepdims=True)
            if type_loss == 'CE':
                x = z - jnp.log(denom)          # log-softmax
            else:
                x = ez / denom                  # softmax (exact; kernel is HBM-bound)

        if type_loss == 'L1':
            ret = jnp.abs(x - t)
        elif type_loss == 'CE':
            ret = -(x * t)
        else:  # 'L2'
            d = x - t
            ret = d * d

        if reduction == 'none':
            o_ref[...] = ret.astype(o_ref.dtype)
        else:
            # Per-row reduction over the class axis (XLU cross-lane reduce).
            # Reduced output traffic is D x smaller than input traffic, so the
            # small (rows, 1) column store is negligible.
            s = jnp.sum(ret, axis=-1, keepdims=True)
            if reduction == 'mean':
                s = s * (1.0 / ret.shape[-1])
            o_ref[...] = s.astype(o_ref.dtype)

    return kernel


def _vmem_budget():
    """(vmem_limit_bytes, per-block I/O+temps budget), per TPU generation."""
    cap = None
    try:
        cap = getattr(pltpu.get_tpu_info(), 'vmem_capacity_bytes', None)
    except Exception:
        cap = None
    if not cap:
        cap = 64 * 1024 * 1024                      # conservative: v7x per-TC VMEM
    limit = min(cap // 2, 64 * 1024 * 1024)         # 32 MiB on v7x, 64 MiB on v5e/v6e
    budget = min(limit // 2, 24 * 1024 * 1024)      # single-block budget incl. temps
    return limit, budget


def _choose_row_tile(R, D, x_dtype, t_dtype, o_dtype, type_loss, regression,
                     reduction, budget):
    """Largest row tile whose double-buffered blocks + in-kernel f32 temporaries
    fit `budget`.  Falls back to the sublane granule for very large D (no
    128-row floor that could blow v7x VMEM); keeps >= 4 (and even) blocks when
    the row count allows, for v7x megacore load balance / pipelining depth."""
    x_isz = jnp.dtype(x_dtype).itemsize
    t_isz = jnp.dtype(t_dtype).itemsize
    o_isz = jnp.dtype(o_dtype).itemsize
    min_isz = min(x_isz, t_isz, o_isz)
    granule = 8 if min_isz >= 4 else (16 if min_isz == 2 else 32)

    # live (tile, D) f32 temporaries inside the kernel (softmax path is heavier)
    f32_temps = 2 if (regression and type_loss != 'CE') else 4
    per_row = 2 * D * (x_isz + t_isz) + f32_temps * D * 4     # 2 buffers per input
    if reduction == 'none':
        per_row += 2 * D * o_isz                              # double-buffered output

    tile = (budget // max(per_row, 1)) // granule * granule
    tile = max(granule, tile)                 # sublane-minimum fallback (large D)
    tile = min(tile, _round_up(R, granule))   # never larger than the problem

    # Keep >= 4 blocks when the row count allows.
    if _round_up(R, granule) >= 4 * granule:
        tile = min(tile, max(granule, _round_up(-(-R // 4), granule)))

    # Prefer an even block count so the two v7x TensorCores get equal work.
    nblk = -(-R // tile)
    if nblk > 1 and nblk % 2 == 1:
        t2 = _round_up(-(-R // (nblk + 1)), granule)
        if granule <= t2 <= tile:
            tile = t2
    return tile


def losses_forward(inputs, targets, *, type_loss='L2', regression=False,
                   reduction='sum', row_tile=None):
    """Pallas-backed equivalent of losses(type_loss, regression, reduction).forward."""
    x = jnp.asarray(inputs)
    t = jnp.asarray(targets)
    orig_shape = x.shape
    D = orig_shape[-1]
    R = int(np.prod(orig_shape[:-1])) if len(orig_shape) > 1 else 1

    out_dtype = jnp.result_type(x.dtype, t.dtype)
    if not jnp.issubdtype(out_dtype, jnp.floating):
        out_dtype = jnp.float32

    # Keep native storage dtype (e.g. bf16) -> minimal HBM traffic; cast in-kernel.
    x2 = x.reshape(R, D)
    t2 = t.reshape(R, D)

    vmem_limit, budget = _vmem_budget()
    if row_tile is None:
        row_tile = _choose_row_tile(R, D, x2.dtype, t2.dtype, out_dtype,
                                    type_loss, regression, reduction, budget)

    grid = (pl.cdiv(R, row_tile),)
    kernel = _make_loss_kernel(type_loss, regression, reduction)

    in_specs = [
        pl.BlockSpec((row_tile, D), lambda i: (i, 0)),
        pl.BlockSpec((row_tile, D), lambda i: (i, 0)),
    ]
    if reduction == 'none':
        out_shape = jax.ShapeDtypeStruct((R, D), out_dtype)
        out_spec = pl.BlockSpec((row_tile, D), lambda i: (i, 0))
    else:
        out_shape = jax.ShapeDtypeStruct((R, 1), out_dtype)
        out_spec = pl.BlockSpec((row_tile, 1), lambda i: (i, 0))

    out = pl.pallas_call(
        kernel,
        out_shape=out_shape,
        grid=grid,
        in_specs=in_specs,
        out_specs=out_spec,
        compiler_params=pltpu.CompilerParams(
            dimension_semantics=("parallel",),
            vmem_limit_bytes=vmem_limit),
    )(x2, t2)

    if reduction == 'none':
        return out.reshape(orig_shape)
    return out[:, 0].reshape(orig_shape[:-1])


def _reference(inputs, targets, *, type_loss='L2', regression=False, reduction='sum'):
    """Pure-JAX reference mirroring the PyTorch module (for validation only)."""
    x = jnp.asarray(inputs, jnp.float32)
    t = jnp.asarray(targets, jnp.float32)
    if type_loss == 'L1':
        if not regression:
            x = jax.nn.softmax(x, axis=-1)
        ret = jnp.abs(x - t)
    elif type_loss == 'CE':
        if not regression:
            x = jax.nn.log_softmax(x, axis=-1)
        ret = -(x * t)
    else:
        if not regression:
            x = jax.nn.softmax(x, axis=-1)
        ret = (x - t) ** 2
    if reduction != 'none':
        ret = jnp.mean(ret, -1) if reduction == 'mean' else jnp.sum(ret, -1)
    return ret


if __name__ == "__main__":
    key = jax.random.PRNGKey(0)
    k1, k2 = jax.random.split(key)

    B, S, D = 2, 8, 32  # small shapes: batch=2, seq=8, classes/hidden=32
    inputs = jax.random.normal(k1, (B, S, D), dtype=jnp.float32)
    # soft "target distribution" over the class axis
    targets = jax.nn.softmax(jax.random.normal(k2, (B, S, D), dtype=jnp.float32),
                             axis=-1)

    ok = True
    for type_loss in ('L2', 'L1', 'CE'):
        for regression in (False, True):
            for reduction in ('sum', 'mean', 'none'):
                got = jax.block_until_ready(
                    losses_forward(inputs, targets, type_loss=type_loss,
                                   regression=regression, reduction=reduction))
                want = _reference(inputs, targets, type_loss=type_loss,
                                  regression=regression, reduction=reduction)
                if got.shape != want.shape or not np.allclose(
                        np.asarray(got), np.asarray(want), atol=1e-5, rtol=1e-4):
                    ok = False

    # default config of the module: L2 + softmax + sum over last dim
    out_default = jax.block_until_ready(losses_forward(inputs, targets))
    assert out_default.shape == (B, S)

    if ok:
        print("KERNEL_OK")
</pallas_src>

<mosaic_0001>
module attributes {stable_mosaic.version = 11 : i64} {
  func.func @kernel(%arg0: i32, %arg1: memref<16x32xf32, #tpu.memory_space<vmem>>, %arg2: memref<16x32xf32, #tpu.memory_space<vmem>>, %arg3: memref<16x1xf32, #tpu.memory_space<vmem>>) attributes {dimension_semantics = [#tpu.dimension_semantics<parallel>], iteration_bounds = array<i64: 1>, scalar_prefetch = 0 : i64, scratch_operands = 0 : i64, tpu.core_type = #tpu.core_type<tc>, window_params = [{transform_indices = @transform_0, window_bounds = array<i64: 16, 32>}, {transform_indices = @transform_1, window_bounds = array<i64: 16, 32>}, {transform_indices = @transform_2, window_bounds = array<i64: 16, 1>}]} {
    %c0 = arith.constant 0 : index
    %c0_0 = arith.constant 0 : index
    %0 = vector.load %arg1[%c0, %c0_0] : memref<16x32xf32, #tpu.memory_space<vmem>>, vector<16x32xf32>
    %c0_1 = arith.constant 0 : index
    %c0_2 = arith.constant 0 : index
    %1 = vector.load %arg2[%c0_1, %c0_2] : memref<16x32xf32, #tpu.memory_space<vmem>>, vector<16x32xf32>
    %cst = arith.constant dense<0xFF800000> : vector<16xf32>
    %2 = vector.multi_reduction <maximumf>, %0, %cst [1] : vector<16x32xf32> to vector<16xf32>
    %3 = vector.shape_cast %2 : vector<16xf32> to vector<16x1xf32>
    %4 = vector.broadcast %3 : vector<16x1xf32> to vector<16x32xf32>
    %5 = arith.subf %0, %4 : vector<16x32xf32>
    %6 = math.exp %5 : vector<16x32xf32>
    %cst_3 = arith.constant dense<0.000000e+00> : vector<16xf32>
    %7 = vector.multi_reduction <add>, %6, %cst_3 [1] : vector<16x32xf32> to vector<16xf32>
    %8 = vector.shape_cast %7 : vector<16xf32> to vector<16x1xf32>
    %9 = vector.broadcast %8 : vector<16x1xf32> to vector<16x32xf32>
    %10 = arith.divf %6, %9 : vector<16x32xf32>
    %11 = arith.subf %10, %1 : vector<16x32xf32>
    %12 = arith.mulf %11, %11 : vector<16x32xf32>
    %cst_4 = arith.constant dense<0.000000e+00> : vector<16xf32>
    %13 = vector.multi_reduction <add>, %12, %cst_4 [1] : vector<16x32xf32> to vector<16xf32>
    %14 = vector.shape_cast %13 : vector<16xf32> to vector<16x1xf32>
    %c0_5 = arith.constant 0 : index
    %c0_6 = arith.constant 0 : index
    %15 = vector.load %arg3[%c0_5, %c0_6] : memref<16x1xf32, #tpu.memory_space<vmem>>, vector<16x1xf32>
    tpu.vector_store %arg3[%c0_5, %c0_6], %14 {strides = array<i32>} : memref<16x1xf32, #tpu.memory_space<vmem>>, vector<16x1xf32>,
    return
  }
  func.func @transform_0(%arg0: i32) -> (i32, i32) {
    %c0_i32 = arith.constant 0 : i32
    %c0_i32_0 = arith.constant 0 : i32
    return %arg0, %c0_i32 : i32, i32
  }
  func.func @transform_1(%arg0: i32) -> (i32, i32) {
    %c0_i32 = arith.constant 0 : i32
    %c0_i32_0 = arith.constant 0 : i32
    return %arg0, %c0_i32 : i32, i32
  }
  func.func @transform_2(%arg0: i32) -> (i32, i32) {
    %c0_i32 = arith.constant 0 : i32
    %c0_i32_0 = arith.constant 0 : i32
    return %arg0, %c0_i32 : i32, i32
  }
}

</mosaic_0001>

<llo_original>
// kernel: tpu_custom_call.1
$region0: #{tpu_custom_call.1}
  #allocation0 [shape = 'u32[]', space=smem, size = 0x4, offset = 0x4, fixed_abs, tag = 'smem constant byte address 0x4 - core index']
  #allocation1 [shape = 'u32[144,128]{1,0:T(1,128)}', space=vmem, size = 0x12000, scoped, tag = 'internal scratch']
  %s0 = inlined_call_operand.hbm [shape: f32[16,32], index: 0, kind: input, shape index: {}]
  %s1 = inlined_call_operand.hbm [shape: f32[16,32], index: 1, kind: input, shape index: {}]
  %s2 = inlined_call_operand.vmem [shape: f32[16,1], index: 2, kind: output, shape index: {}]
  %s3 = sld [smem:[#allocation0]]
  $region26: #{tpu_custom_call.1} parent=0
    _
  %s5 = ssub.s32 1, %s3
  %s6 = scalar_select 0, %s5, %s3
  $region1: #{tpu_custom_call.1} parent=0
    #allocation2 [shape = 'u8[8192]{0}', space=vmem, size = 0x2000, scoped, tag = 'input window, operand 0, single buffered']
    #allocation3 [shape = 's32[1]{0}', space=sflag, size = 0x4, scoped, tag = 'scoped memory for tpu_custom_call.1']
    #allocation4 [shape = 'u8[8192]{0}', space=vmem, size = 0x2000, scoped, tag = 'input window, operand 1, single buffered']
    #allocation5 [shape = 's32[1]{0}', space=sflag, size = 0x4, scoped, tag = 'scoped memory for tpu_custom_call.1']
    %7 = vsyncpa [#allocation3], 0
    %8 = vsyncpa [#allocation5], 0
    // Predicated region
    $region2: #{tpu_custom_call.1} parent=1 // pred_check
      _
    $region3: #{tpu_custom_call.1} parent=1 // pred_check_branch
      %10 = sbr.rel (0) target = $region5
    $region4: #{tpu_custom_call.1} parent=1 // pred_region
      %s12 = ssub.s32 256, 256
      %13 = vsyncadd [#allocation3], %s12
      %s14 = sshll.u32 [#allocation2], 4
      %s15 = int_to_ptr.vmem [resolvable:$true] %s14
      %20 = dma.hbm_to_vmem [thread:$0]  %s0, 256, %s15, [#allocation3], 128, 128, 8
    $region5: #{tpu_custom_call.1} parent=1 // pred_fallthru
      _
    // Predicated region
    $region6: #{tpu_custom_call.1} parent=1 // pred_check
      _
    $region7: #{tpu_custom_call.1} parent=1 // pred_check_branch
      %22 = sbr.rel (0) target = $region9
    $region8: #{tpu_custom_call.1} parent=1 // pred_region
      %s24 = ssub.s32 256, 256
      %25 = vsyncadd [#allocation5], %s24
      %s26 = sshll.u32 [#allocation4], 4
      %s27 = int_to_ptr.vmem [resolvable:$true] %s26
      %32 = dma.hbm_to_vmem [thread:$0]  %s1, 256, %s27, [#allocation5], 128, 128, 8
    $region9: #{tpu_custom_call.1} parent=1 // pred_fallthru
      _
    // Predicated region
    $region10: #{tpu_custom_call.1} parent=1 // pred_check
      _
    $region11: #{tpu_custom_call.1} parent=1 // pred_check_branch
      %34 = sbr.rel (0) target = $region13
    $region12: #{tpu_custom_call.1} parent=1 // pred_region
      %35 = dma.done [#allocation3], 256
    $region13: #{tpu_custom_call.1} parent=1 // pred_fallthru
      _
    // Predicated region
    $region14: #{tpu_custom_call.1} parent=1 // pred_check
      _
    $region15: #{tpu_custom_call.1} parent=1 // pred_check_branch
      %37 = sbr.rel (0) target = $region17
    $region16: #{tpu_custom_call.1} parent=1 // pred_region
      %38 = dma.done [#allocation5], 256
    $region17: #{tpu_custom_call.1} parent=1 // pred_fallthru
      _
    %v39 = vld [vmem:[#allocation2] sm:$0xff]
    %v40 = vld [vmem:[#allocation2 + $0x8] sm:$0xff]
    %v41 = vld [vmem:[#allocation4] sm:$0xff]
    %v42 = vld [vmem:[#allocation4 + $0x8] sm:$0xff]
    %vm43 = vcmask 261120
    %v44 = vsel %vm43, %v39, -inf
    %45 = vmax.xlane.f32.xlu0 %v44
    %v46 = vpop.xlane.xlu0 %45
    %v47 = vsel %vm43, %v40, -inf
    %48 = vmax.xlane.f32.xlu0 %v47
    %v49 = vpop.xlane.xlu0 %48
    %v50 = vsub.f32 %v39, %v46
    %v51 = vsub.f32 %v40, %v49
    %v52 = vmul.f32 %v50, 1.442695
    %v53 = vpow.pop %v52
    %v54 = vmul.f32 %v51, 1.442695
    %v55 = vpow.pop %v54
    %v56 = vsel %vm43, %v53, 0.0
    %57 = vadd.xlane.f32.xlu0 %v56
    %v58 = vpop.xlane.xlu0 %57
    %v59 = vsel %vm43, %v55, 0.0
    %60 = vadd.xlane.f32.xlu0 %v59
    %v61 = vpop.xlane.xlu0 %60
    %v62 = vrcp.pop %v58
    %v63 = vmul.f32 %v53, %v62
    %v64 = vrcp.pop %v61
    %v65 = vmul.f32 %v55, %v64
    %v66 = vsub.f32 %v63, %v41
    %v67 = vsub.f32 %v65, %v42
    %v68 = vmul.f32 %v66, %v66
    %v69 = vmul.f32 %v67, %v67
    %v70 = vsel %vm43, %v68, 0.0
    %71 = vadd.xlane.f32.xlu0 %v70
    %v72 = vpop.xlane.xlu0 %71
    %v73 = vsel %vm43, %v69, 0.0
    %74 = vadd.xlane.f32.xlu0 %v73
    %v75 = vpop.xlane.xlu0 %74
    %vm76 = vcmask 7168
    %77 = vst.msk [vmem:[%s2] sm:$0xff] %vm76, %v72
    %78 = vst.msk [vmem:[%s2 + $0x8] sm:$0xff] %vm76, %v75
    // Predicated region
    $region18: #{tpu_custom_call.1} parent=1 // pred_check
      _
    $region19: #{tpu_custom_call.1} parent=1 // pred_check_branch
      %80 = sbr.rel (0) target = $region21
    $region20: #{tpu_custom_call.1} parent=1 // pred_region
      _
    $region21: #{tpu_custom_call.1} parent=1 // pred_fallthru
      _
    // Predicated region
    $region22: #{tpu_custom_call.1} parent=1 // pred_check
      _
    $region23: #{tpu_custom_call.1} parent=1 // pred_check_branch
      %82 = sbr.rel (0) target = $region25
    $region24: #{tpu_custom_call.1} parent=1 // pred_region
      _
    $region25: #{tpu_custom_call.1} parent=1 // pred_fallthru
      _
    %83 = vsyncpa [#allocation3], 1
    %84 = vsyncpa [#allocation5], 1

</llo_original>
